<compile_context>
chip_gen: v7x
topology: tpu7x:2x2x1
jax: 0.10.0
libtpu: 0.0.40
codegen_flags: <defaults>
</compile_context>

<pallas_src>
import functools
import math

import jax
import jax.numpy as jnp
from jax import lax
from jax.experimental import pallas as pl
from jax.experimental.pallas import tpu as pltpu


def _cdiv(a, b):
    return -(-a // b)


def _as_i32(v):
    """Wrap an unsigned 32-bit python int into a signed-int32 python int."""
    v &= 0xFFFFFFFF
    return v - (1 << 32) if v >= (1 << 31) else v


_MIX_A = _as_i32(0x9E3779B1)   # golden-ratio multiplier
_MIX_B = _as_i32(0x85EBCA6B)   # murmur3 fmix32 constants
_MIX_C = _as_i32(0xC2B2AE35)


def make_positional_encoding_table(d_model, max_len=5000, dtype=jnp.float32):
    """Deterministic PE buffer, identical to the torch __init__ construction.
    Build it once in the model dtype and reuse it (the wrapper only casts if
    dtypes differ, so under jit the cast constant-folds away)."""
    position = jnp.arange(max_len, dtype=jnp.float32)[:, None]            # (L, 1)
    div_term = jnp.exp(jnp.arange(0, d_model, 2, dtype=jnp.float32)
                       * -(math.log(10000.0) / d_model))                  # (D/2,)
    ang = position * div_term                                             # (L, D/2)
    # interleave: pe[:, 0::2] = sin, pe[:, 1::2] = cos
    pe = jnp.stack([jnp.sin(ang), jnp.cos(ang)], axis=-1).reshape(max_len, d_model)
    return pe.astype(dtype)


def _lsr32(v, k):
    """Logical right shift of an int32 array by a static amount k >= 1."""
    return (v >> k) & ((1 << (32 - k)) - 1)


def _pos_enc_kernel(seed_ref, x_ref, pe_ref, o_ref, *,
                    p_drop, training, fold, n_cols):
    x = x_ref[...]
    pe = pe_ref[...]                       # (fold, tC)
    tB, tC = x.shape

    if fold == 1:
        y = x + pe                         # (tB, tC) + (1, tC) broadcast
    else:
        # Row tiles always start at a multiple of `fold`, so tile row
        # (g*fold + j) needs pe row j.
        y = (x.reshape(tB // fold, fold, tC) + pe[None, :, :]).reshape(tB, tC)

    if training and p_drop > 0.0:
        # Stateless counter-based dropout: fmix32 hash of (global index, seed).
        # Mask is independent of the tiling; only plain int32 VPU ops are used.
        # TODO(synk): statistically equivalent to torch dropout, but not
        # bit-identical to torch's RNG stream.
        r0 = pl.program_id(1) * tB
        c0 = pl.program_id(0) * tC
        rows_g = lax.broadcasted_iota(jnp.int32, (tB, tC), 0) + r0
        cols_g = lax.broadcasted_iota(jnp.int32, (tB, tC), 1) + c0
        idx = rows_g * jnp.int32(_as_i32(n_cols)) + cols_g   # unique mod 2^32
        h = idx * jnp.int32(_MIX_A) + seed_ref[0]
        h = h ^ _lsr32(h, 16)
        h = h * jnp.int32(_MIX_B)
        h = h ^ _lsr32(h, 13)
        h = h * jnp.int32(_MIX_C)
        h = h ^ _lsr32(h, 16)
        # h ~ uniform over int32; drop iff h < thresh  =>  P(drop) = p_drop.
        thresh = int(round(p_drop * 2.0 ** 32)) - 2 ** 31
        thresh = max(-(2 ** 31), min(2 ** 31 - 1, thresh))
        keep = h >= jnp.int32(thresh)
        scale = jnp.asarray(1.0 / (1.0 - p_drop), dtype=y.dtype)
        y = jnp.where(keep, y * scale, jnp.zeros_like(y))

    o_ref[...] = y.astype(o_ref.dtype)


def _choose_tiles(rows, cols, itemsize, row_q, target_bytes):
    """Pick (tB, tC) obeying the (8,128)/full-extent rule with ~target_bytes per
    x/out buffer; tB is either full rows or a multiple of the sublane quantum."""
    tB = rows if rows <= row_q else row_q
    cols_budget = max(128, target_bytes // (tB * itemsize))
    if cols_budget >= cols:
        tC = cols
        if rows > tB:                                  # grow rows with leftover budget
            rows_budget = max(row_q, target_bytes // (cols * itemsize))
            tB = min(rows, max(row_q, (rows_budget // row_q) * row_q))
    else:
        tC = max(128, (cols_budget // 128) * 128)

    # Keep >= 2 grid steps so the DMA pipeline overlaps and v7x's two
    # TensorCores both get work.
    if _cdiv(cols, tC) * _cdiv(rows, tB) < 2:
        if cols >= 256:
            tC = max(128, _cdiv(_cdiv(cols, 2), 128) * 128)
        elif rows >= 2 * row_q and tB >= 2 * row_q:
            tB = max(row_q, ((tB // 2) // row_q) * row_q)
    return tB, tC


def positional_encoding(x, pe_table, *, p_drop=0.1, training=False, seed=0,
                        donate_x=False):
    """x: (B, S, D) float array. pe_table: (max_len >= S, D).
    Returns dropout(x + pe[:S]) with module-forward semantics."""
    B, S, D = x.shape
    C = S * D
    dtype = x.dtype
    itemsize = jnp.dtype(dtype).itemsize
    row_q = max(8, 32 // itemsize)          # sublane quantum: 8 f32 / 16 bf16 / 32 i8

    pe_flat = pe_table[:S].reshape(C)
    if pe_flat.dtype != dtype:              # no-op if pe was built in x.dtype
        pe_flat = pe_flat.astype(dtype)

    # Small-batch refold: (B, C) -> (B*fold, C/fold) so row tiles fill sublanes.
    fold = 1
    if B < row_q and C % 128 == 0:
        r = 1
        while r * B < row_q:
            r *= 2
        while r > 1 and not (C % r == 0 and (C // r) % 128 == 0 and C // r >= 128):
            r //= 2
        fold = r
    rows, cols = B * fold, C // fold
    x2 = x.reshape(rows, cols)
    pe2 = pe_flat.reshape(fold, cols)

    train = bool(training) and float(p_drop) > 0.0
    target = (3 if train else 4) * 1024 * 1024       # per-buffer tile target
    tB, tC = _choose_tiles(rows, cols, itemsize, row_q, target)
    n_col_tiles = _cdiv(cols, tC)
    n_row_tiles = _cdiv(rows, tB)

    # Explicit VMEM budget: double-buffered x + out + pe, plus headroom for the
    # int32 dropout temporaries in training.  Keeps clear of v5e's 16 MiB
    # default scoped limit and well under v7x's 64 MiB physical VMEM.
    tile_bytes = tB * tC * itemsize
    pe_bytes = fold * tC * itemsize
    vmem_need = 2 * 2 * tile_bytes + 2 * pe_bytes
    if train:
        vmem_need += 3 * tB * tC * 4
    vmem_limit = int(min(56 * 2 ** 20, max(32 * 2 ** 20, 2 * vmem_need)))

    seed_arr = jnp.array([seed], dtype=jnp.int32)    # scalar-prefetched into SMEM

    kernel = functools.partial(_pos_enc_kernel, p_drop=float(p_drop),
                               training=train, fold=fold, n_cols=cols)

    out2 = pl.pallas_call(
        kernel,
        out_shape=jax.ShapeDtypeStruct((rows, cols), dtype),
        grid_spec=pltpu.PrefetchScalarGridSpec(
            num_scalar_prefetch=1,                   # seed -> SMEM
            # Column tiles outer, batch-row tiles inner: pe's block index only
            # depends on the outer axis, so a pe slab is DMA'd once per column
            # tile and stays resident while the inner batch loop runs.
            grid=(n_col_tiles, n_row_tiles),
            in_specs=[
                pl.BlockSpec((tB, tC), lambda c, b, seed: (b, c)),     # x
                pl.BlockSpec((fold, tC), lambda c, b, seed: (0, c)),   # pe
            ],
            out_specs=pl.BlockSpec((tB, tC), lambda c, b, seed: (b, c)),
        ),
        compiler_params=pltpu.CompilerParams(
            dimension_semantics=("parallel", "parallel"),
            vmem_limit_bytes=vmem_limit),
        # Optional in-place update when the caller donates x (operand index 1,
        # after the scalar-prefetch seed): removes the extra output allocation.
        input_output_aliases=({1: 0} if donate_x else {}),
    )(seed_arr, x2, pe2)

    return out2.reshape(B, S, D)


if __name__ == "__main__":
    key = jax.random.PRNGKey(0)
    B, S, D = 2, 8, 32            # small shapes consistent with (batch, seq, d_model)
    max_len = 64

    x = jax.random.normal(key, (B, S, D), dtype=jnp.float32)
    pe = make_positional_encoding_table(D, max_len=max_len, dtype=jnp.float32)
    ref = x + pe[None, :S, :]

    # Eval-mode forward (dropout is identity), matching module.eval() semantics.
    out = positional_encoding(x, pe, p_drop=0.1, training=False, seed=0)
    out = jax.block_until_ready(out)
    assert out.shape == x.shape and out.dtype == x.dtype
    assert jnp.allclose(out, ref, atol=1e-6), "positional encoding mismatch"

    # Training-mode smoke test: kept entries equal ref / (1 - p), dropped are 0,
    # and the drop rate lands in a sane band around p.
    p = 0.5
    out_tr = positional_encoding(x, pe, p_drop=p, training=True, seed=123)
    out_tr = jax.block_until_ready(out_tr)
    assert out_tr.shape == x.shape and out_tr.dtype == x.dtype
    kept = out_tr != 0
    assert jnp.allclose(jnp.where(kept, out_tr, 0.0),
                        jnp.where(kept, ref / (1.0 - p), 0.0), atol=1e-5), \
        "dropout-kept entries mismatch"
    drop_frac = float(jnp.mean((out_tr == 0).astype(jnp.float32)))
    assert 0.2 < drop_frac < 0.8, f"dropout rate {drop_frac} far from p={p}"

    print("KERNEL_OK")
</pallas_src>

<mosaic_0001>
module attributes {stable_mosaic.version = 11 : i64} {
  func.func @_pos_enc_kernel(%arg0: i32, %arg1: i32, %arg2: memref<1xi32, #tpu.memory_space<smem>>, %arg3: memref<4x128xf32, #tpu.memory_space<vmem>>, %arg4: memref<2x128xf32, #tpu.memory_space<vmem>>, %arg5: memref<4x128xf32, #tpu.memory_space<vmem>>) attributes {dimension_semantics = [#tpu.dimension_semantics<parallel>, #tpu.dimension_semantics<parallel>], iteration_bounds = array<i64: 1, 1>, scalar_prefetch = 1 : i64, scratch_operands = 0 : i64, tpu.core_type = #tpu.core_type<tc>, window_params = [{transform_indices = @transform_0, window_bounds = array<i64: 4, 128>}, {transform_indices = @transform_1, window_bounds = array<i64: 2, 128>}, {transform_indices = @transform_2, window_bounds = array<i64: 4, 128>}]} {
    %c0 = arith.constant 0 : index
    %c0_0 = arith.constant 0 : index
    %0 = vector.load %arg3[%c0, %c0_0] : memref<4x128xf32, #tpu.memory_space<vmem>>, vector<4x128xf32>
    %c0_1 = arith.constant 0 : index
    %c0_2 = arith.constant 0 : index
    %1 = vector.load %arg4[%c0_1, %c0_2] : memref<2x128xf32, #tpu.memory_space<vmem>>, vector<2x128xf32>
    %2 = vector.shape_cast %0 : vector<4x128xf32> to vector<2x2x128xf32>
    %3 = vector.shape_cast %1 : vector<2x128xf32> to vector<1x2x128xf32>
    %4 = vector.broadcast %3 : vector<1x2x128xf32> to vector<2x2x128xf32>
    %5 = arith.addf %2, %4 : vector<2x2x128xf32>
    %6 = vector.shape_cast %5 : vector<2x2x128xf32> to vector<4x128xf32>
    %c0_3 = arith.constant 0 : index
    %c0_4 = arith.constant 0 : index
    %7 = vector.load %arg5[%c0_3, %c0_4] : memref<4x128xf32, #tpu.memory_space<vmem>>, vector<4x128xf32>
    tpu.vector_store %arg5[%c0_3, %c0_4], %6 {strides = array<i32>} : memref<4x128xf32, #tpu.memory_space<vmem>>, vector<4x128xf32>,
    return
  }
  func.func @transform_0(%arg0: i32, %arg1: i32, %arg2: memref<1xi32, #tpu.memory_space<smem>>) -> (i32, i32) {
    %c0_i32 = arith.constant 0 : i32
    return %arg1, %arg0 : i32, i32
  }
  func.func @transform_1(%arg0: i32, %arg1: i32, %arg2: memref<1xi32, #tpu.memory_space<smem>>) -> (i32, i32) {
    %c0_i32 = arith.constant 0 : i32
    %c0_i32_0 = arith.constant 0 : i32
    return %c0_i32, %arg0 : i32, i32
  }
  func.func @transform_2(%arg0: i32, %arg1: i32, %arg2: memref<1xi32, #tpu.memory_space<smem>>) -> (i32, i32) {
    %c0_i32 = arith.constant 0 : i32
    return %arg1, %arg0 : i32, i32
  }
}

</mosaic_0001>

<llo_original>
// kernel: tpu_custom_call.1
$region0: #{tpu_custom_call.1}
  #allocation0 [shape = 'u32[]', space=smem, size = 0x4, offset = 0x4, fixed_abs, tag = 'smem constant byte address 0x4 - core index']
  #allocation1 [shape = 'u32[144,128]{1,0:T(1,128)}', space=vmem, size = 0x12000, scoped, tag = 'internal scratch']
  #allocation2 [shape = 's32[1]{0}', space=sflag, size = 0x4, scoped, tag = 'scoped memory for tpu_custom_call.1']
  #allocation3 [shape = 's32[1]{0:T(128)S(6)}', space=smem, size = 0x200, scoped, tag = 'prefetched SMEM operand 0']
  %s0 = inlined_call_operand.<no memory space> [shape: s32[1], index: 0, kind: input, shape index: {}]
  %s1 = inlined_call_operand.hbm [shape: f32[4,128], index: 1, kind: input, shape index: {}]
  %s2 = inlined_call_operand.vmem [shape: f32[2,128], index: 2, kind: input, shape index: {}]
  %s3 = inlined_call_operand.hbm [shape: f32[4,128], index: 3, kind: output, shape index: {}]
  %s4 = sld [smem:[#allocation0]]
  $region22: #{tpu_custom_call.1} parent=0
    _
  %s6 = ssub.s32 1, %s4
  %s7 = scalar_select 0, %s6, %s4
  %8 = sst [smem:[#allocation3]] %s0
  $region1: #{tpu_custom_call.1} parent=0
    #allocation4 [shape = 'u8[2048]{0}', space=vmem, size = 0x800, scoped, tag = 'input window, operand 1, single buffered']
    #allocation5 [shape = 's32[1]{0}', space=sflag, size = 0x4, scoped, tag = 'scoped memory for tpu_custom_call.1']
    #allocation6 [shape = 's32[1]{0}', space=sflag, size = 0x4, scoped, tag = 'scoped memory for tpu_custom_call.1']
    #allocation7 [shape = 'u8[2048]{0}', space=vmem, size = 0x800, scoped, tag = 'output window, operand 0, single buffered']
    %9 = vsyncpa [#allocation5], 0
    %10 = vsyncpa [#allocation6], 0
    // Predicated region
    $region2: #{tpu_custom_call.1} parent=1 // pred_check
      _
    $region3: #{tpu_custom_call.1} parent=1 // pred_check_branch
      %12 = sbr.rel (0) target = $region5
    $region4: #{tpu_custom_call.1} parent=1 // pred_region
      %s14 = ssub.s32 64, 64
      %15 = vsyncadd [#allocation5], %s14
      %s17 = sshll.u32 [#allocation4], 4
      %s18 = int_to_ptr.vmem [resolvable:$true] %s17
      %20 = dma.hbm_to_vmem [thread:$0]  %s1, 64, %s18, [#allocation5]
    $region5: #{tpu_custom_call.1} parent=1 // pred_fallthru
      _
    // Predicated region
    $region6: #{tpu_custom_call.1} parent=1 // pred_check
      _
    $region7: #{tpu_custom_call.1} parent=1 // pred_check_branch
      %22 = sbr.rel (0) target = $region9
    $region8: #{tpu_custom_call.1} parent=1 // pred_region
      _
    $region9: #{tpu_custom_call.1} parent=1 // pred_fallthru
      _
    // Predicated region
    $region10: #{tpu_custom_call.1} parent=1 // pred_check
      _
    $region11: #{tpu_custom_call.1} parent=1 // pred_check_branch
      %24 = sbr.rel (0) target = $region13
    $region12: #{tpu_custom_call.1} parent=1 // pred_region
      %25 = dma.done [#allocation5], 64
    $region13: #{tpu_custom_call.1} parent=1 // pred_fallthru
      _
    %v26 = vld [vmem:[#allocation4] sm:$0xf]
    %v27 = vld [vmem:[%s2] sm:$0x3]
    %v30 = vunpack.c.l.s4 1983009808
    %v31 = vunpack.c.0.s8 %v30
    %v32 = vlaneseq
    %v33 = vshrl.u32 %v32, 7
    %v34 = vsub.s32 %v31, %v33
    %v35 = vrot.slane %v26, %v34
    %v36 = vcombine.high %v35, %v35
    %v39 = vadd.f32 %v35, %v27
    %v40 = vadd.f32 %v36, %v27
    %v43 = vcombine.low %v39, %v40
    %v45 = vunpack.c.l.s4 1983009808
    %v46 = vunpack.c.0.s8 %v45
    %v47 = vlaneseq
    %v48 = vshrl.u32 %v47, 7
    %v49 = vsub.s32 %v46, %v48
    %v50 = vrot.slane %v43, %v49
    %52 = vst [vmem:[#allocation7] sm:$0xf] %v50
    // Predicated region
    $region14: #{tpu_custom_call.1} parent=1 // pred_check
      _
    $region15: #{tpu_custom_call.1} parent=1 // pred_check_branch
      %54 = sbr.rel (0) target = $region17
    $region16: #{tpu_custom_call.1} parent=1 // pred_region
      %s56 = ssub.s32 64, 64
      %57 = vsyncadd [#allocation6], %s56
      %s59 = sshll.u32 [#allocation7], 4
      %s60 = int_to_ptr.vmem [resolvable:$true] %s59
      %62 = dma.vmem_to_hbm [thread:$0]  %s60, 64, %s3, [#allocation6]
    $region17: #{tpu_custom_call.1} parent=1 // pred_fallthru
      _
    // Predicated region
    $region18: #{tpu_custom_call.1} parent=1 // pred_check
      _
    $region19: #{tpu_custom_call.1} parent=1 // pred_check_branch
      %64 = sbr.rel (0) target = $region21
    $region20: #{tpu_custom_call.1} parent=1 // pred_region
      %65 = dma.done [#allocation6], 64
    $region21: #{tpu_custom_call.1} parent=1 // pred_fallthru
      _
    %66 = vsyncpa [#allocation5], 1
    %67 = vsyncpa [#allocation6], 1

</llo_original>
